<compile_context>
chip_gen: v7x
topology: tpu7x:2x2x1
jax: 0.10.0
libtpu: 0.0.40
codegen_flags: <defaults>
</compile_context>

<pallas_src>
import jax
import jax.numpy as jnp
from jax.experimental import pallas as pl
from jax.experimental.pallas import tpu as pltpu

LANE = 128  # lane-dense width for the final logits store


# --------------------------------------------------------------------------
# Fused Pallas kernel (entire forward pass, VMEM-resident)
# --------------------------------------------------------------------------
def _make_fused_kernel(n_layer):
    def kernel(*refs):
        it = iter(refs)
        x_ref = next(it)
        adj_ref = next(it)
        pool_ref = next(it)
        fc_w_ref = next(it)
        conv_ws = [next(it) for _ in range(n_layer)]
        conv_bs = [next(it) for _ in range(n_layer)]
        pred_ws = [next(it) for _ in range(n_layer + 1)]   # BN already folded in
        pred_bs = [next(it) for _ in range(n_layer + 1)]
        lin_w_ref = next(it)                               # padded to LANE cols
        lin_b_ref = next(it)                               # padded (pad = -1e30)
        out_ref = next(it)

        x = x_ref[...]
        adj = adj_ref[...]          # already I + A
        pool = pool_ref[...]        # mean-pool matrix [B, N]

        # layer-0 readout of raw features + its (BN-folded) prediction head
        pooled = jnp.dot(pool, x, preferred_element_type=jnp.float32)
        score = jnp.maximum(
            jnp.dot(pooled, pred_ws[0][...], preferred_element_type=jnp.float32)
            + pred_bs[0][...], 0.0)

        # hid_x = fc(x)  (no bias)
        h = jnp.dot(x, fc_w_ref[...], preferred_element_type=jnp.float32)

        # conv layers + per-layer readout + score accumulation, all in VMEM
        for l in range(n_layer):
            agg = jnp.dot(adj, h, preferred_element_type=jnp.float32)
            h = jnp.maximum(
                jnp.dot(agg, conv_ws[l][...], preferred_element_type=jnp.float32)
                + conv_bs[l][...], 0.0)
            pooled = jnp.dot(pool, h, preferred_element_type=jnp.float32)
            score = score + jnp.maximum(
                jnp.dot(pooled, pred_ws[l + 1][...],
                        preferred_element_type=jnp.float32)
                + pred_bs[l + 1][...], 0.0)

        # final classifier (lane-padded) + log_softmax; padded lanes carry a
        # -1e30 bias so exp() underflows and they never affect the result.
        z = jnp.dot(score, lin_w_ref[...], preferred_element_type=jnp.float32) \
            + lin_b_ref[...]
        m = jnp.max(z, axis=-1, keepdims=True)
        lse = jnp.log(jnp.sum(jnp.exp(z - m), axis=-1, keepdims=True)) + m
        out_ref[...] = z - lse

    return kernel


# --------------------------------------------------------------------------
# Parameter prep: fold eval-mode BN into the prediction Linears, pad classifier
# --------------------------------------------------------------------------
def _prepare_fused_params(params):
    pred_w, pred_b = [], []
    for (w, b), (gamma, beta, mu, var) in zip(params["pred"], params["bns"]):
        scale = gamma * jax.lax.rsqrt(var + 1e-5)          # [1, din]
        pred_w.append(scale.reshape(-1, 1) * w)            # [din, nhid]
        pred_b.append(b + jnp.dot(beta - mu * scale, w))   # [1, nhid]

    lin_w, lin_b = params["lin_w"], params["lin_b"]
    nhid, nclass = lin_w.shape
    lin_w_pad = jnp.zeros((nhid, LANE), jnp.float32).at[:, :nclass].set(lin_w)
    lin_b_pad = jnp.full((1, LANE), -1e30, jnp.float32).at[:, :nclass].set(lin_b)
    return pred_w, pred_b, lin_w_pad, lin_b_pad


# --------------------------------------------------------------------------
# CPA forward: one pallas_call
# --------------------------------------------------------------------------
def cpa_forward(x, adj_hat, pool_mat, params):
    n_layer = len(params["convs"])
    nclass = params["lin_w"].shape[1]
    B = pool_mat.shape[0]

    pred_w, pred_b, lin_w_pad, lin_b_pad = _prepare_fused_params(params)

    inputs = [x, adj_hat, pool_mat, params["fc_w"]]
    inputs += [w for (w, _) in params["convs"]]
    inputs += [b for (_, b) in params["convs"]]
    inputs += pred_w
    inputs += pred_b
    inputs += [lin_w_pad, lin_b_pad]

    vmem_spec = pl.BlockSpec(memory_space=pltpu.MemorySpace.VMEM)
    out_padded = pl.pallas_call(
        _make_fused_kernel(n_layer),
        out_shape=jax.ShapeDtypeStruct((B, LANE), jnp.float32),
        in_specs=[vmem_spec] * len(inputs),
        out_specs=vmem_spec,
    )(*inputs)
    return out_padded[:, :nclass]


# --------------------------------------------------------------------------
# Deterministic parameter construction + example run
# --------------------------------------------------------------------------
def make_params(key, nfeat, nhid, nclass, n_layer):
    ks = jax.random.split(key, 16)
    params = {}
    # fc: Linear(nfeat, nhid, bias=False); weights stored as [in, out]
    params["fc_w"] = jax.random.normal(ks[0], (nfeat, nhid), jnp.float32) * 0.1

    # conv layers: deepcopy of a single layer -> identical initial weights
    conv_w = jax.random.normal(ks[1], (nhid, nhid), jnp.float32) * 0.1
    conv_b = jax.random.normal(ks[2], (1, nhid), jnp.float32) * 0.1
    params["convs"] = [(conv_w, conv_b) for _ in range(n_layer)]

    # linears_prediction + bns_fc (layer 0 operates on nfeat, rest on nhid)
    preds, bns = [], []
    for layer in range(n_layer + 1):
        din = nfeat if layer == 0 else nhid
        kw, kb, kg, kbe = jax.random.split(ks[3 + layer], 4)
        preds.append((jax.random.normal(kw, (din, nhid), jnp.float32) * 0.1,
                      jax.random.normal(kb, (1, nhid), jnp.float32) * 0.1))
        bns.append((1.0 + 0.1 * jax.random.normal(kg, (1, din), jnp.float32),  # gamma
                    0.1 * jax.random.normal(kbe, (1, din), jnp.float32),       # beta
                    jnp.zeros((1, din), jnp.float32),                          # running mean
                    jnp.ones((1, din), jnp.float32)))                          # running var
    params["pred"] = preds
    params["bns"] = bns

    # final classifier Linear(nhid, nclass)
    params["lin_w"] = jax.random.normal(ks[10], (nhid, nclass), jnp.float32) * 0.1
    params["lin_b"] = jax.random.normal(ks[11], (1, nclass), jnp.float32) * 0.1
    return params


if __name__ == "__main__":
    key = jax.random.PRNGKey(0)
    N, E, B = 16, 48, 2                 # nodes, edges, graphs
    NFEAT, NHID, NCLASS, NLAYER = 32, 32, 4, 2

    k_x, k_src, k_dst, k_p = jax.random.split(key, 4)
    x = jax.random.normal(k_x, (N, NFEAT), jnp.float32)

    # random edge_index [2, E] -> dense adjacency, plus self loops (I + A)
    src = jax.random.randint(k_src, (E,), 0, N)
    dst = jax.random.randint(k_dst, (E,), 0, N)
    adj = jnp.zeros((N, N), jnp.float32).at[dst, src].set(1.0)
    adj_hat = adj + jnp.eye(N, dtype=jnp.float32)

    # batch assignment (first half -> graph 0, second half -> graph 1)
    batch = jnp.concatenate([jnp.zeros(N // 2, jnp.int32),
                             jnp.ones(N - N // 2, jnp.int32)])
    one_hot = (batch[None, :] == jnp.arange(B)[:, None]).astype(jnp.float32)
    counts = jnp.maximum(one_hot.sum(axis=1, keepdims=True), 1.0)
    pool_mat = one_hot / counts          # readout == 'mean'

    params = make_params(k_p, NFEAT, NHID, NCLASS, NLAYER)

    fwd = jax.jit(cpa_forward)
    out = jax.block_until_ready(fwd(x, adj_hat, pool_mat, params))
    assert out.shape == (B, NCLASS)
    # log_softmax rows should sum (in prob space) to ~1
    assert jnp.allclose(jnp.exp(out).sum(axis=-1), 1.0, atol=1e-4)
    print("KERNEL_OK")
</pallas_src>

<mosaic_0001>
module attributes {stable_mosaic.version = 11 : i64} {
  func.func @kernel(%arg0: memref<16x32xf32, #tpu.memory_space<vmem>>, %arg1: memref<16x16xf32, #tpu.memory_space<vmem>>, %arg2: memref<2x16xf32, #tpu.memory_space<vmem>>, %arg3: memref<32x32xf32, #tpu.memory_space<vmem>>, %arg4: memref<32x32xf32, #tpu.memory_space<vmem>>, %arg5: memref<32x32xf32, #tpu.memory_space<vmem>>, %arg6: memref<1x32xf32, #tpu.memory_space<vmem>>, %arg7: memref<1x32xf32, #tpu.memory_space<vmem>>, %arg8: memref<32x32xf32, #tpu.memory_space<vmem>>, %arg9: memref<32x32xf32, #tpu.memory_space<vmem>>, %arg10: memref<32x32xf32, #tpu.memory_space<vmem>>, %arg11: memref<1x32xf32, #tpu.memory_space<vmem>>, %arg12: memref<1x32xf32, #tpu.memory_space<vmem>>, %arg13: memref<1x32xf32, #tpu.memory_space<vmem>>, %arg14: memref<32x128xf32, #tpu.memory_space<vmem>>, %arg15: memref<1x128xf32, #tpu.memory_space<vmem>>, %arg16: memref<2x128xf32, #tpu.memory_space<vmem>>) attributes {dimension_semantics = [], scalar_prefetch = 0 : i64, scratch_operands = 0 : i64, tpu.core_type = #tpu.core_type<tc>} {
    %c0 = arith.constant 0 : index
    %c0_0 = arith.constant 0 : index
    %0 = vector.load %arg0[%c0, %c0_0] : memref<16x32xf32, #tpu.memory_space<vmem>>, vector<16x32xf32>
    %c0_1 = arith.constant 0 : index
    %c0_2 = arith.constant 0 : index
    %1 = vector.load %arg1[%c0_1, %c0_2] : memref<16x16xf32, #tpu.memory_space<vmem>>, vector<16x16xf32>
    %c0_3 = arith.constant 0 : index
    %c0_4 = arith.constant 0 : index
    %2 = vector.load %arg2[%c0_3, %c0_4] : memref<2x16xf32, #tpu.memory_space<vmem>>, vector<2x16xf32>
    %cst = arith.constant dense<0.000000e+00> : vector<2x32xf32>
    %3 = tpu.matmul %2, %0, %cst {dimension_numbers = #tpu.dot_dimension_numbers<[1], [0], [0], [1], [0, 0, 1, 1], [], []>} : vector<2x16xf32>, vector<16x32xf32>, vector<2x32xf32> -> vector<2x32xf32>
    %c0_5 = arith.constant 0 : index
    %c0_6 = arith.constant 0 : index
    %4 = vector.load %arg8[%c0_5, %c0_6] : memref<32x32xf32, #tpu.memory_space<vmem>>, vector<32x32xf32>
    %cst_7 = arith.constant dense<0.000000e+00> : vector<2x32xf32>
    %5 = tpu.matmul %3, %4, %cst_7 {dimension_numbers = #tpu.dot_dimension_numbers<[1], [0], [0], [1], [0, 0, 1, 1], [], []>} : vector<2x32xf32>, vector<32x32xf32>, vector<2x32xf32> -> vector<2x32xf32>
    %c0_8 = arith.constant 0 : index
    %c0_9 = arith.constant 0 : index
    %6 = vector.load %arg11[%c0_8, %c0_9] : memref<1x32xf32, #tpu.memory_space<vmem>>, vector<1x32xf32>
    %7 = vector.broadcast %6 : vector<1x32xf32> to vector<2x32xf32>
    %8 = arith.addf %5, %7 : vector<2x32xf32>
    %cst_10 = arith.constant 0.000000e+00 : f32
    %9 = vector.broadcast %cst_10 : f32 to vector<2x32xf32>
    %10 = arith.maximumf %8, %9 : vector<2x32xf32>
    %c0_11 = arith.constant 0 : index
    %c0_12 = arith.constant 0 : index
    %11 = vector.load %arg3[%c0_11, %c0_12] : memref<32x32xf32, #tpu.memory_space<vmem>>, vector<32x32xf32>
    %cst_13 = arith.constant dense<0.000000e+00> : vector<16x32xf32>
    %12 = tpu.matmul %0, %11, %cst_13 {dimension_numbers = #tpu.dot_dimension_numbers<[1], [0], [0], [1], [0, 0, 1, 1], [], []>} : vector<16x32xf32>, vector<32x32xf32>, vector<16x32xf32> -> vector<16x32xf32>
    %cst_14 = arith.constant dense<0.000000e+00> : vector<16x32xf32>
    %13 = tpu.matmul %1, %12, %cst_14 {dimension_numbers = #tpu.dot_dimension_numbers<[1], [0], [0], [1], [0, 0, 1, 1], [], []>} : vector<16x16xf32>, vector<16x32xf32>, vector<16x32xf32> -> vector<16x32xf32>
    %c0_15 = arith.constant 0 : index
    %c0_16 = arith.constant 0 : index
    %14 = vector.load %arg4[%c0_15, %c0_16] : memref<32x32xf32, #tpu.memory_space<vmem>>, vector<32x32xf32>
    %cst_17 = arith.constant dense<0.000000e+00> : vector<16x32xf32>
    %15 = tpu.matmul %13, %14, %cst_17 {dimension_numbers = #tpu.dot_dimension_numbers<[1], [0], [0], [1], [0, 0, 1, 1], [], []>} : vector<16x32xf32>, vector<32x32xf32>, vector<16x32xf32> -> vector<16x32xf32>
    %c0_18 = arith.constant 0 : index
    %c0_19 = arith.constant 0 : index
    %16 = vector.load %arg6[%c0_18, %c0_19] : memref<1x32xf32, #tpu.memory_space<vmem>>, vector<1x32xf32>
    %17 = vector.broadcast %16 : vector<1x32xf32> to vector<16x32xf32>
    %18 = arith.addf %15, %17 : vector<16x32xf32>
    %cst_20 = arith.constant 0.000000e+00 : f32
    %19 = vector.broadcast %cst_20 : f32 to vector<16x32xf32>
    %20 = arith.maximumf %18, %19 : vector<16x32xf32>
    %cst_21 = arith.constant dense<0.000000e+00> : vector<2x32xf32>
    %21 = tpu.matmul %2, %20, %cst_21 {dimension_numbers = #tpu.dot_dimension_numbers<[1], [0], [0], [1], [0, 0, 1, 1], [], []>} : vector<2x16xf32>, vector<16x32xf32>, vector<2x32xf32> -> vector<2x32xf32>
    %c0_22 = arith.constant 0 : index
    %c0_23 = arith.constant 0 : index
    %22 = vector.load %arg9[%c0_22, %c0_23] : memref<32x32xf32, #tpu.memory_space<vmem>>, vector<32x32xf32>
    %cst_24 = arith.constant dense<0.000000e+00> : vector<2x32xf32>
    %23 = tpu.matmul %21, %22, %cst_24 {dimension_numbers = #tpu.dot_dimension_numbers<[1], [0], [0], [1], [0, 0, 1, 1], [], []>} : vector<2x32xf32>, vector<32x32xf32>, vector<2x32xf32> -> vector<2x32xf32>
    %c0_25 = arith.constant 0 : index
    %c0_26 = arith.constant 0 : index
    %24 = vector.load %arg12[%c0_25, %c0_26] : memref<1x32xf32, #tpu.memory_space<vmem>>, vector<1x32xf32>
    %25 = vector.broadcast %24 : vector<1x32xf32> to vector<2x32xf32>
    %26 = arith.addf %23, %25 : vector<2x32xf32>
    %cst_27 = arith.constant 0.000000e+00 : f32
    %27 = vector.broadcast %cst_27 : f32 to vector<2x32xf32>
    %28 = arith.maximumf %26, %27 : vector<2x32xf32>
    %29 = arith.addf %10, %28 : vector<2x32xf32>
    %cst_28 = arith.constant dense<0.000000e+00> : vector<16x32xf32>
    %30 = tpu.matmul %1, %20, %cst_28 {dimension_numbers = #tpu.dot_dimension_numbers<[1], [0], [0], [1], [0, 0, 1, 1], [], []>} : vector<16x16xf32>, vector<16x32xf32>, vector<16x32xf32> -> vector<16x32xf32>
    %c0_29 = arith.constant 0 : index
    %c0_30 = arith.constant 0 : index
    %31 = vector.load %arg5[%c0_29, %c0_30] : memref<32x32xf32, #tpu.memory_space<vmem>>, vector<32x32xf32>
    %cst_31 = arith.constant dense<0.000000e+00> : vector<16x32xf32>
    %32 = tpu.matmul %30, %31, %cst_31 {dimension_numbers = #tpu.dot_dimension_numbers<[1], [0], [0], [1], [0, 0, 1, 1], [], []>} : vector<16x32xf32>, vector<32x32xf32>, vector<16x32xf32> -> vector<16x32xf32>
    %c0_32 = arith.constant 0 : index
    %c0_33 = arith.constant 0 : index
    %33 = vector.load %arg7[%c0_32, %c0_33] : memref<1x32xf32, #tpu.memory_space<vmem>>, vector<1x32xf32>
    %34 = vector.broadcast %33 : vector<1x32xf32> to vector<16x32xf32>
    %35 = arith.addf %32, %34 : vector<16x32xf32>
    %cst_34 = arith.constant 0.000000e+00 : f32
    %36 = vector.broadcast %cst_34 : f32 to vector<16x32xf32>
    %37 = arith.maximumf %35, %36 : vector<16x32xf32>
    %cst_35 = arith.constant dense<0.000000e+00> : vector<2x32xf32>
    %38 = tpu.matmul %2, %37, %cst_35 {dimension_numbers = #tpu.dot_dimension_numbers<[1], [0], [0], [1], [0, 0, 1, 1], [], []>} : vector<2x16xf32>, vector<16x32xf32>, vector<2x32xf32> -> vector<2x32xf32>
    %c0_36 = arith.constant 0 : index
    %c0_37 = arith.constant 0 : index
    %39 = vector.load %arg10[%c0_36, %c0_37] : memref<32x32xf32, #tpu.memory_space<vmem>>, vector<32x32xf32>
    %cst_38 = arith.constant dense<0.000000e+00> : vector<2x32xf32>
    %40 = tpu.matmul %38, %39, %cst_38 {dimension_numbers = #tpu.dot_dimension_numbers<[1], [0], [0], [1], [0, 0, 1, 1], [], []>} : vector<2x32xf32>, vector<32x32xf32>, vector<2x32xf32> -> vector<2x32xf32>
    %c0_39 = arith.constant 0 : index
    %c0_40 = arith.constant 0 : index
    %41 = vector.load %arg13[%c0_39, %c0_40] : memref<1x32xf32, #tpu.memory_space<vmem>>, vector<1x32xf32>
    %42 = vector.broadcast %41 : vector<1x32xf32> to vector<2x32xf32>
    %43 = arith.addf %40, %42 : vector<2x32xf32>
    %cst_41 = arith.constant 0.000000e+00 : f32
    %44 = vector.broadcast %cst_41 : f32 to vector<2x32xf32>
    %45 = arith.maximumf %43, %44 : vector<2x32xf32>
    %46 = arith.addf %29, %45 : vector<2x32xf32>
    %c0_42 = arith.constant 0 : index
    %c0_43 = arith.constant 0 : index
    %47 = vector.load %arg14[%c0_42, %c0_43] : memref<32x128xf32, #tpu.memory_space<vmem>>, vector<32x128xf32>
    %cst_44 = arith.constant dense<0.000000e+00> : vector<2x128xf32>
    %48 = tpu.matmul %46, %47, %cst_44 {dimension_numbers = #tpu.dot_dimension_numbers<[1], [0], [0], [1], [0, 0, 1, 1], [], []>} : vector<2x32xf32>, vector<32x128xf32>, vector<2x128xf32> -> vector<2x128xf32>
    %c0_45 = arith.constant 0 : index
    %c0_46 = arith.constant 0 : index
    %49 = vector.load %arg15[%c0_45, %c0_46] : memref<1x128xf32, #tpu.memory_space<vmem>>, vector<1x128xf32>
    %50 = vector.broadcast %49 : vector<1x128xf32> to vector<2x128xf32>
    %51 = arith.addf %48, %50 : vector<2x128xf32>
    %cst_47 = arith.constant dense<0xFF800000> : vector<2xf32>
    %52 = vector.multi_reduction <maximumf>, %51, %cst_47 [1] : vector<2x128xf32> to vector<2xf32>
    %53 = vector.shape_cast %52 : vector<2xf32> to vector<2x1xf32>
    %54 = vector.broadcast %53 : vector<2x1xf32> to vector<2x128xf32>
    %55 = arith.subf %51, %54 : vector<2x128xf32>
    %56 = math.exp %55 : vector<2x128xf32>
    %cst_48 = arith.constant dense<0.000000e+00> : vector<2xf32>
    %57 = vector.multi_reduction <add>, %56, %cst_48 [1] : vector<2x128xf32> to vector<2xf32>
    %58 = vector.shape_cast %57 : vector<2xf32> to vector<2x1xf32>
    %59 = math.log %58 : vector<2x1xf32>
    %60 = arith.addf %59, %53 : vector<2x1xf32>
    %61 = vector.broadcast %60 : vector<2x1xf32> to vector<2x128xf32>
    %62 = arith.subf %51, %61 : vector<2x128xf32>
    %c0_49 = arith.constant 0 : index
    %c0_50 = arith.constant 0 : index
    %63 = vector.load %arg16[%c0_49, %c0_50] : memref<2x128xf32, #tpu.memory_space<vmem>>, vector<2x128xf32>
    tpu.vector_store %arg16[%c0_49, %c0_50], %62 {strides = array<i32>} : memref<2x128xf32, #tpu.memory_space<vmem>>, vector<2x128xf32>,
    return
  }
}

</mosaic_0001>

<llo_original>
// kernel: cpa_forward.1
$region0: #{cpa_forward.1}
  #allocation0 [shape = 'u32[]', space=smem, size = 0x4, offset = 0x4, fixed_abs, tag = 'smem constant byte address 0x4 - core index']
  #allocation1 [shape = 'u32[144,128]{1,0:T(1,128)}', space=vmem, size = 0x12000, scoped, tag = 'internal scratch']
  %s0 = inlined_call_operand.vmem [shape: f32[16,32], index: 0, kind: input, shape index: {}]
  %s1 = inlined_call_operand.vmem [shape: f32[16,16], index: 1, kind: input, shape index: {}]
  %s2 = inlined_call_operand.vmem [shape: f32[2,16], index: 2, kind: input, shape index: {}]
  %s3 = inlined_call_operand.vmem [shape: f32[32,32], index: 3, kind: input, shape index: {}]
  %s4 = inlined_call_operand.vmem [shape: f32[32,32], index: 4, kind: input, shape index: {}]
  %s5 = inlined_call_operand.vmem [shape: f32[32,32], index: 5, kind: input, shape index: {}]
  %s6 = inlined_call_operand.vmem [shape: f32[1,32], index: 6, kind: input, shape index: {}]
  %s7 = inlined_call_operand.vmem [shape: f32[1,32], index: 7, kind: input, shape index: {}]
  %s8 = inlined_call_operand.vmem [shape: f32[32,32], index: 8, kind: input, shape index: {}]
  %s9 = inlined_call_operand.vmem [shape: f32[32,32], index: 9, kind: input, shape index: {}]
  %s10 = inlined_call_operand.vmem [shape: f32[32,32], index: 10, kind: input, shape index: {}]
  %s11 = inlined_call_operand.vmem [shape: f32[1,32], index: 11, kind: input, shape index: {}]
  %s12 = inlined_call_operand.vmem [shape: f32[1,32], index: 12, kind: input, shape index: {}]
  %s13 = inlined_call_operand.vmem [shape: f32[1,32], index: 13, kind: input, shape index: {}]
  %s14 = inlined_call_operand.vmem [shape: f32[32,128], index: 14, kind: input, shape index: {}]
  %s15 = inlined_call_operand.vmem [shape: f32[1,128], index: 15, kind: input, shape index: {}]
  %s16 = inlined_call_operand.hbm [shape: f32[2,128], index: 16, kind: output, shape index: {}]
  %s17 = sld [smem:[#allocation0]]
  $region74: #{cpa_forward.1} parent=0
    _
  %s19 = ssub.s32 1, %s17
  %s20 = scalar_select 0, %s19, %s17
  $region1: #{cpa_forward.1} parent=0
    #allocation2 [shape = 'u8[1024]{0}', space=vmem, size = 0x400, scoped, tag = 'output window, operand 0, single buffered']
    #allocation3 [shape = 's32[1]{0}', space=sflag, size = 0x4, scoped, tag = 'scoped memory for cpa_forward.1']
    %21 = vsyncpa [#allocation3], 0
    // Predicated region
    $region2: #{cpa_forward.1} parent=1 // pred_check
      _
    $region3: #{cpa_forward.1} parent=1 // pred_check_branch
      %23 = sbr.rel (0) target = $region5
    $region4: #{cpa_forward.1} parent=1 // pred_region
      _
    $region5: #{cpa_forward.1} parent=1 // pred_fallthru
      _
    // Predicated region
    $region6: #{cpa_forward.1} parent=1 // pred_check
      _
    $region7: #{cpa_forward.1} parent=1 // pred_check_branch
      %25 = sbr.rel (0) target = $region9
    $region8: #{cpa_forward.1} parent=1 // pred_region
      _
    $region9: #{cpa_forward.1} parent=1 // pred_fallthru
      _
    // Predicated region
    $region10: #{cpa_forward.1} parent=1 // pred_check
      _
    $region11: #{cpa_forward.1} parent=1 // pred_check_branch
      %27 = sbr.rel (0) target = $region13
    $region12: #{cpa_forward.1} parent=1 // pred_region
      _
    $region13: #{cpa_forward.1} parent=1 // pred_fallthru
      _
    // Predicated region
    $region14: #{cpa_forward.1} parent=1 // pred_check
      _
    $region15: #{cpa_forward.1} parent=1 // pred_check_branch
      %29 = sbr.rel (0) target = $region17
    $region16: #{cpa_forward.1} parent=1 // pred_region
      _
    $region17: #{cpa_forward.1} parent=1 // pred_fallthru
      _
    // Predicated region
    $region18: #{cpa_forward.1} parent=1 // pred_check
      _
    $region19: #{cpa_forward.1} parent=1 // pred_check_branch
      %31 = sbr.rel (0) target = $region21
    $region20: #{cpa_forward.1} parent=1 // pred_region
      _
    $region21: #{cpa_forward.1} parent=1 // pred_fallthru
      _
    // Predicated region
    $region22: #{cpa_forward.1} parent=1 // pred_check
      _
    $region23: #{cpa_forward.1} parent=1 // pred_check_branch
      %33 = sbr.rel (0) target = $region25
    $region24: #{cpa_forward.1} parent=1 // pred_region
      _
    $region25: #{cpa_forward.1} parent=1 // pred_fallthru
      _
    // Predicated region
    $region26: #{cpa_forward.1} parent=1 // pred_check
      _
    $region27: #{cpa_forward.1} parent=1 // pred_check_branch
      %35 = sbr.rel (0) target = $region29
    $region28: #{cpa_forward.1} parent=1 // pred_region
      _
    $region29: #{cpa_forward.1} parent=1 // pred_fallthru
      _
    // Predicated region
    $region30: #{cpa_forward.1} parent=1 // pred_check
      _
    $region31: #{cpa_forward.1} parent=1 // pred_check_branch
      %37 = sbr.rel (0) target = $region33
    $region32: #{cpa_forward.1} parent=1 // pred_region
      _
    $region33: #{cpa_forward.1} parent=1 // pred_fallthru
      _
    // Predicated region
    $region34: #{cpa_forward.1} parent=1 // pred_check
      _
    $region35: #{cpa_forward.1} parent=1 // pred_check_branch
      %39 = sbr.rel (0) target = $region37
    $region36: #{cpa_forward.1} parent=1 // pred_region
      _
    $region37: #{cpa_forward.1} parent=1 // pred_fallthru
      _
    // Predicated region
    $region38: #{cpa_forward.1} parent=1 // pred_check
      _
    $region39: #{cpa_forward.1} parent=1 // pred_check_branch
      %41 = sbr.rel (0) target = $region41
    $region40: #{cpa_forward.1} parent=1 // pred_region
      _
    $region41: #{cpa_forward.1} parent=1 // pred_fallthru
      _
    // Predicated region
    $region42: #{cpa_forward.1} parent=1 // pred_check
      _
    $region43: #{cpa_forward.1} parent=1 // pred_check_branch
      %43 = sbr.rel (0) target = $region45
    $region44: #{cpa_forward.1} parent=1 // pred_region
      _
    $region45: #{cpa_forward.1} parent=1 // pred_fallthru
      _
    // Predicated region
    $region46: #{cpa_forward.1} parent=1 // pred_check
      _
    $region47: #{cpa_forward.1} parent=1 // pred_check_branch
      %45 = sbr.rel (0) target = $region49
    $region48: #{cpa_forward.1} parent=1 // pred_region
      _
    $region49: #{cpa_forward.1} parent=1 // pred_fallthru
      _
    // Predicated region
    $region50: #{cpa_forward.1} parent=1 // pred_check
      _
    $region51: #{cpa_forward.1} parent=1 // pred_check_branch
      %47 = sbr.rel (0) target = $region53
    $region52: #{cpa_forward.1} parent=1 // pred_region
      _
    $region53: #{cpa_forward.1} parent=1 // pred_fallthru
      _
    // Predicated region
    $region54: #{cpa_forward.1} parent=1 // pred_check
      _
    $region55: #{cpa_forward.1} parent=1 // pred_check_branch
      %49 = sbr.rel (0) target = $region57
    $region56: #{cpa_forward.1} parent=1 // pred_region
      _
    $region57: #{cpa_forward.1} parent=1 // pred_fallthru
      _
    // Predicated region
    $region58: #{cpa_forward.1} parent=1 // pred_check
      _
    $region59: #{cpa_forward.1} parent=1 // pred_check_branch
      %51 = sbr.rel (0) target = $region61
    $region60: #{cpa_forward.1} parent=1 // pred_region
      _
    $region61: #{cpa_forward.1} parent=1 // pred_fallthru
      _
    // Predicated region
    $region62: #{cpa_forward.1} parent=1 // pred_check
      _
    $region63: #{cpa_forward.1} parent=1 // pred_check_branch
      %53 = sbr.rel (0) target = $region65
    $region64: #{cpa_forward.1} parent=1 // pred_region
      _
    $region65: #{cpa_forward.1} parent=1 // pred_fallthru
      _
    %v54 = vld [vmem:[%s0] sm:$0xff]
    %v55 = vld [vmem:[%s0 + $0x8] sm:$0xff]
    %v56 = vld [vmem:[%s1] sm:$0xff]
    %v57 = vld [vmem:[%s1 + $0x8] sm:$0xff]
    %v58 = vld [vmem:[%s2] sm:$0x3]
    %vm59 = vcmask 130048
    %v61 = vsel %vm59, %v58, 0
    %63 = vmatprep.subr.mxu0 0.0
    %64 = vmatpush1.msra.mxu0 %v54
    %65 = vmatprep.subr.mxu0 0.0
    %66 = vmatpush1.msra.mxu0 %v55
    %67 = vmatprep.subr.mxu0 0.0
    %68 = vmatpush1.msra.mxu0 0.0
    %69 = vmatprep.subr.mxu0 0.0
    %70 = vmatpush1.msra.mxu0 0.0
    %71 = vmatprep.subr.mxu0 0.0
    %72 = vmatpush1.msra.mxu0 0.0
    %73 = vmatprep.subr.mxu0 0.0
    %74 = vmatpush1.msra.mxu0 0.0
    %75 = vmatprep.subr.mxu0 0.0
    %76 = vmatpush1.msra.mxu0 0.0
    %77 = vmatprep.subr.mxu0 0.0
    %78 = vmatpush1.msra.mxu0 0.0
    %79 = vmatprep.subr.mxu0 0.0
    %80 = vmatpush1.msra.mxu0 0.0
    %81 = vmatprep.subr.mxu0 0.0
    %82 = vmatpush1.msra.mxu0 0.0
    %83 = vmatprep.subr.mxu0 0.0
    %84 = vmatpush1.msra.mxu0 0.0
    %85 = vmatprep.subr.mxu0 0.0
    %86 = vmatpush1.msra.mxu0 0.0
    %87 = vmatprep.subr.mxu0 0.0
    %88 = vmatpush1.msra.mxu0 0.0
    %89 = vmatprep.subr.mxu0 0.0
    %90 = vmatpush1.msra.mxu0 0.0
    %91 = vmatprep.subr.mxu0 0.0
    %92 = vmatpush1.msra.mxu0 0.0
    %93 = vmatprep.subr.mxu0 0.0
    %94 = vmatpush1.msra.mxu0 0.0
    %95 = vmatprep.subr.mxu0 0.0
    %96 = vmatpush1.msra.mxu0 0.0
    %97 = vmatprep.subr.mxu0 0.0
    %98 = vmatpush1.msra.mxu0 0.0
    %99 = vmatprep.subr.mxu0 0.0
    %100 = vmatpush1.msra.mxu0 0.0
    %101 = vmatprep.subr.mxu0 0.0
    %102 = vmatpush1.msra.mxu0 0.0
    %103 = vmatprep.subr.mxu0 0.0
    %104 = vmatpush1.msra.mxu0 0.0
    %105 = vmatprep.subr.mxu0 0.0
    %106 = vmatpush1.msra.mxu0 0.0
    %107 = vmatprep.subr.mxu0 0.0
    %108 = vmatpush1.msra.mxu0 0.0
    %109 = vmatprep.subr.mxu0 0.0
    %110 = vmatpush1.msra.mxu0 0.0
    %111 = vmatprep.subr.mxu0 0.0
    %112 = vmatpush1.msra.mxu0 0.0
    %113 = vmatprep.subr.mxu0 0.0
    %114 = vmatpush1.msra.mxu0 0.0
    %115 = vmatprep.subr.mxu0 0.0
    %116 = vmatpush1.msra.mxu0 0.0
    %117 = vmatprep.subr.mxu0 0.0
    %118 = vmatpush1.msra.mxu0 0.0
    %119 = vmatprep.subr.mxu0 0.0
    %120 = vmatpush1.msra.mxu0 0.0
    %121 = vmatprep.subr.mxu0 0.0
    %122 = vmatpush1.msra.mxu0 0.0
    %123 = vmatprep.subr.mxu0 0.0
    %124 = vmatpush1.msra.mxu0 0.0
    %125 = vmatprep.subr.mxu0 0.0
    %126 = vmatpush1.msra.mxu0 0.0
    %127 = vmatprep.mubr.f32.mxu0 0.0
    %128 = vmatmul.mubr.f32.gmra.mrb[0].mxu0 %v61
    %v129 = vpop.f32.mrb[0].mxu0
    %v130 = vadd.f32 0.0, %v129
    %v131 = vpop.f32.mrb[0].mxu0
    %132 = vdwg.mxu0
    %v133 = vld [vmem:[%s8] sm:$0xff]
    %v134 = vld [vmem:[%s8 + $0x8] sm:$0xff]
    %v135 = vld [vmem:[%s8 + $0x10] sm:$0xff]
    %v136 = vld [vmem:[%s8 + $0x18] sm:$0xff]
    %v137 = vld [vmem:[%s11] sm:$0x1]
    %v139 = vlaneseq
    %v140 = vshrl.u32 %v139, 7
    %v141 = vsub.s32 0, %v140
    %v142 = vrot.slane %v137, %v141
    %vm144 = vcmask 261120
    %v146 = vsel %vm144, %v130, 0
    %148 = vmatprep.subr.mxu0 0.0
    %149 = vmatpush1.msra.mxu0 %v133
    %150 = vmatprep.subr.mxu0 0.0
    %151 = vmatpush1.msra.mxu0 %v134
    %152 = vmatprep.subr.mxu0 0.0
    %153 = vmatpush1.msra.mxu0 %v135
    %154 = vmatprep.subr.mxu0 0.0
    %155 = vmatpush1.msra.mxu0 %v136
    %156 = vmatprep.subr.mxu0 0.0
    %157 = vmatpush1.msra.mxu0 0.0
    %158 = vmatprep.subr.mxu0 0.0
    %159 = vmatpush1.msra.mxu0 0.0
    %160 = vmatprep.subr.mxu0 0.0
    %161 = vmatpush1.msra.mxu0 0.0
    %162 = vmatprep.subr.mxu0 0.0
    %163 = vmatpush1.msra.mxu0 0.0
    %164 = vmatprep.subr.mxu0 0.0
    %165 = vmatpush1.msra.mxu0 0.0
    %166 = vmatprep.subr.mxu0 0.0
    %167 = vmatpush1.msra.mxu0 0.0
    %168 = vmatprep.subr.mxu0 0.0
    %169 = vmatpush1.msra.mxu0 0.0
    %170 = vmatprep.subr.mxu0 0.0
    %171 = vmatpush1.msra.mxu0 0.0
    %172 = vmatprep.subr.mxu0 0.0
    %173 = vmatpush1.msra.mxu0 0.0
    %174 = vmatprep.subr.mxu0 0.0
    %175 = vmatpush1.msra.mxu0 0.0
    %176 = vmatprep.subr.mxu0 0.0
    %177 = vmatpush1.msra.mxu0 0.0
    %178 = vmatprep.subr.mxu0 0.0
    %179 = vmatpush1.msra.mxu0 0.0
    %180 = vmatprep.subr.mxu0 0.0
    %181 = vmatpush1.msra.mxu0 0.0
    %182 = vmatprep.subr.mxu0 0.0
    %183 = vmatpush1.msra.mxu0 0.0
    %184 = vmatprep.subr.mxu0 0.0
    %185 = vmatpush1.msra.mxu0 0.0
    %186 = vmatprep.subr.mxu0 0.0
    %187 = vmatpush1.msra.mxu0 0.0
    %188 = vmatprep.subr.mxu0 0.0
    %189 = vmatpush1.msra.mxu0 0.0
    %190 = vmatprep.subr.mxu0 0.0
    %191 = vmatpush1.msra.mxu0 0.0
    %192 = vmatprep.subr.mxu0 0.0
    %193 = vmatpush1.msra.mxu0 0.0
    %194 = vmatprep.subr.mxu0 0.0
    %195 = vmatpush1.msra.mxu0 0.0
    %196 = vmatprep.subr.mxu0 0.0
    %197 = vmatpush1.msra.mxu0 0.0
    %198 = vmatprep.subr.mxu0 0.0
    %199 = vmatpush1.msra.mxu0 0.0
    %200 = vmatprep.subr.mxu0 0.0
    %201 = vmatpush1.msra.mxu0 0.0
    %202 = vmatprep.subr.mxu0 0.0
    %203 = vmatpush1.msra.mxu0 0.0
    %204 = vmatprep.subr.mxu0 0.0
    %205 = vmatpush1.msra.mxu0 0.0
    %206 = vmatprep.subr.mxu0 0.0
    %207 = vmatpush1.msra.mxu0 0.0
    %208 = vmatprep.subr.mxu0 0.0
    %209 = vmatpush1.msra.mxu0 0.0
    %210 = vmatprep.subr.mxu0 0.0
    %211 = vmatpush1.msra.mxu0 0.0
    %212 = vmatprep.mubr.f32.mxu0 0.0
    %213 = vmatmul.mubr.f32.gmra.mrb[0].mxu0 %v146
    %v214 = vpop.f32.mrb[0].mxu0
    %v215 = vadd.f32 %v142, %v214
    %v216 = vpop.f32.mrb[0].mxu0
    %217 = vdwg.mxu0
    %v218 = vmax.f32 %v215, 0.0
    %v219 = vld [vmem:[%s3] sm:$0xff]
    %v220 = vld [vmem:[%s3 + $0x8] sm:$0xff]
    %v221 = vld [vmem:[%s3 + $0x10] sm:$0xff]
    %v222 = vld [vmem:[%s3 + $0x18] sm:$0xff]
    %v224 = vsel %vm144, %v54, 0
    %v227 = vsel %vm144, %v55, 0
    %229 = vmatprep.subr.mxu0 0.0
    %230 = vmatpush1.msra.mxu0 %v219
    %231 = vmatprep.subr.mxu0 0.0
    %232 = vmatpush1.msra.mxu0 %v220
    %233 = vmatprep.subr.mxu0 0.0
    %234 = vmatpush1.msra.mxu0 %v221
    %235 = vmatprep.subr.mxu0 0.0
    %236 = vmatpush1.msra.mxu0 %v222
    %237 = vmatprep.subr.mxu0 0.0
    %238 = vmatpush1.msra.mxu0 0.0
    %239 = vmatprep.subr.mxu0 0.0
    %240 = vmatpush1.msra.mxu0 0.0
    %241 = vmatprep.subr.mxu0 0.0
    %242 = vmatpush1.msra.mxu0 0.0
    %243 = vmatprep.subr.mxu0 0.0
    %244 = vmatpush1.msra.mxu0 0.0
    %245 = vmatprep.subr.mxu0 0.0
    %246 = vmatpush1.msra.mxu0 0.0
    %247 = vmatprep.subr.mxu0 0.0
    %248 = vmatpush1.msra.mxu0 0.0
    %249 = vmatprep.subr.mxu0 0.0
    %250 = vmatpush1.msra.mxu0 0.0
    %251 = vmatprep.subr.mxu0 0.0
    %252 = vmatpush1.msra.mxu0 0.0
    %253 = vmatprep.subr.mxu0 0.0
    %254 = vmatpush1.msra.mxu0 0.0
    %255 = vmatprep.subr.mxu0 0.0
    %256 = vmatpush1.msra.mxu0 0.0
    %257 = vmatprep.subr.mxu0 0.0
    %258 = vmatpush1.msra.mxu0 0.0
    %259 = vmatprep.subr.mxu0 0.0
    %260 = vmatpush1.msra.mxu0 0.0
    %261 = vmatprep.subr.mxu0 0.0
    %262 = vmatpush1.msra.mxu0 0.0
    %263 = vmatprep.subr.mxu0 0.0
    %264 = vmatpush1.msra.mxu0 0.0
    %265 = vmatprep.subr.mxu0 0.0
    %266 = vmatpush1.msra.mxu0 0.0
    %267 = vmatprep.subr.mxu0 0.0
    %268 = vmatpush1.msra.mxu0 0.0
    %269 = vmatprep.subr.mxu0 0.0
    %270 = vmatpush1.msra.mxu0 0.0
    %271 = vmatprep.subr.mxu0 0.0
    %272 = vmatpush1.msra.mxu0 0.0
    %273 = vmatprep.subr.mxu0 0.0
    %274 = vmatpush1.msra.mxu0 0.0
    %275 = vmatprep.subr.mxu0 0.0
    %276 = vmatpush1.msra.mxu0 0.0
    %277 = vmatprep.subr.mxu0 0.0
    %278 = vmatpush1.msra.mxu0 0.0
    %279 = vmatprep.subr.mxu0 0.0
    %280 = vmatpush1.msra.mxu0 0.0
    %281 = vmatprep.subr.mxu0 0.0
    %282 = vmatpush1.msra.mxu0 0.0
    %283 = vmatprep.subr.mxu0 0.0
    %284 = vmatpush1.msra.mxu0 0.0
    %285 = vmatprep.subr.mxu0 0.0
    %286 = vmatpush1.msra.mxu0 0.0
    %287 = vmatprep.subr.mxu0 0.0
    %288 = vmatpush1.msra.mxu0 0.0
    %289 = vmatprep.subr.mxu0 0.0
    %290 = vmatpush1.msra.mxu0 0.0
    %291 = vmatprep.subr.mxu0 0.0
    %292 = vmatpush1.msra.mxu0 0.0
    %293 = vmatprep.mubr.f32.mxu0 0.0
    %294 = vmatmul.mubr.f32.gmra.mrb[0].mxu0 %v224
    %v295 = vpop.f32.mrb[0].mxu0
    %v296 = vadd.f32 0.0, %v295
    %v297 = vpop.f32.mrb[0].mxu0
    %298 = vmatprep.mubr.f32.mxu0 0.0
    %299 = vmatmul.mubr.f32.gmra.mrb[0].mxu0 %v227
    %v300 = vpop.f32.mrb[0].mxu0
    %v301 = vadd.f32 0.0, %v300
    %v302 = vpop.f32.mrb[0].mxu0
    %303 = vdwg.mxu0
    %v305 = vsel %vm59, %v56, 0
    %v308 = vsel %vm59, %v57, 0
    %310 = vmatprep.subr.mxu0 0.0
    %311 = vmatpush1.msra.mxu0 %v296
    %312 = vmatprep.subr.mxu0 0.0
    %313 = vmatpush1.msra.mxu0 %v301
    %314 = vmatprep.subr.mxu0 0.0
    %315 = vmatpush1.msra.mxu0 0.0
    %316 = vmatprep.subr.mxu0 0.0
    %317 = vmatpush1.msra.mxu0 0.0
    %318 = vmatprep.subr.mxu0 0.0
    %319 = vmatpush1.msra.mxu0 0.0
    %320 = vmatprep.subr.mxu0 0.0
    %321 = vmatpush1.msra.mxu0 0.0
    %322 = vmatprep.subr.mxu0 0.0
    %323 = vmatpush1.msra.mxu0 0.0
    %324 = vmatprep.subr.mxu0 0.0
    %325 = vmatpush1.msra.mxu0 0.0
    %326 = vmatprep.subr.mxu0 0.0
    %327 = vmatpush1.msra.mxu0 0.0
    %328 = vmatprep.subr.mxu0 0.0
    %329 = vmatpush1.msra.mxu0 0.0
    %330 = vmatprep.subr.mxu0 0.0
    %331 = vmatpush1.msra.mxu0 0.0
    %332 = vmatprep.subr.mxu0 0.0
    %333 = vmatpush1.msra.mxu0 0.0
    %334 = vmatprep.subr.mxu0 0.0
    %335 = vmatpush1.msra.mxu0 0.0
    %336 = vmatprep.subr.mxu0 0.0
    %337 = vmatpush1.msra.mxu0 0.0
    %338 = vmatprep.subr.mxu0 0.0
    %339 = vmatpush1.msra.mxu0 0.0
    %340 = vmatprep.subr.mxu0 0.0
    %341 = vmatpush1.msra.mxu0 0.0
    %342 = vmatprep.subr.mxu0 0.0
    %343 = vmatpush1.msra.mxu0 0.0
    %344 = vmatprep.subr.mxu0 0.0
    %345 = vmatpush1.msra.mxu0 0.0
    %346 = vmatprep.subr.mxu0 0.0
    %347 = vmatpush1.msra.mxu0 0.0
    %348 = vmatprep.subr.mxu0 0.0
    %349 = vmatpush1.msra.mxu0 0.0
    %350 = vmatprep.subr.mxu0 0.0
    %351 = vmatpush1.msra.mxu0 0.0
    %352 = vmatprep.subr.mxu0 0.0
    %353 = vmatpush1.msra.mxu0 0.0
    %354 = vmatprep.subr.mxu0 0.0
    %355 = vmatpush1.msra.mxu0 0.0
    %356 = vmatprep.subr.mxu0 0.0
    %357 = vmatpush1.msra.mxu0 0.0
    %358 = vmatprep.subr.mxu0 0.0
    %359 = vmatpush1.msra.mxu0 0.0
    %360 = vmatprep.subr.mxu0 0.0
    %361 = vmatpush1.msra.mxu0 0.0
    %362 = vmatprep.subr.mxu0 0.0
    %363 = vmatpush1.msra.mxu0 0.0
    %364 = vmatprep.subr.mxu0 0.0
    %365 = vmatpush1.msra.mxu0 0.0
    %366 = vmatprep.subr.mxu0 0.0
    %367 = vmatpush1.msra.mxu0 0.0
    %368 = vmatprep.subr.mxu0 0.0
    %369 = vmatpush1.msra.mxu0 0.0
    %370 = vmatprep.subr.mxu0 0.0
    %371 = vmatpush1.msra.mxu0 0.0
    %372 = vmatprep.subr.mxu0 0.0
    %373 = vmatpush1.msra.mxu0 0.0
    %374 = vmatprep.mubr.f32.mxu0 0.0
    %375 = vmatmul.mubr.f32.gmra.mrb[0].mxu0 %v305
    %v376 = vpop.f32.mrb[0].mxu0
    %v377 = vadd.f32 0.0, %v376
    %v378 = vpop.f32.mrb[0].mxu0
    %379 = vmatprep.mubr.f32.mxu0 0.0
    %380 = vmatmul.mubr.f32.gmra.mrb[0].mxu0 %v308
    %v381 = vpop.f32.mrb[0].mxu0
    %v382 = vadd.f32 0.0, %v381
    %v383 = vpop.f32.mrb[0].mxu0
    %384 = vdwg.mxu0
    %v385 = vld [vmem:[%s4] sm:$0xff]
    %v386 = vld [vmem:[%s4 + $0x8] sm:$0xff]
    %v387 = vld [vmem:[%s4 + $0x10] sm:$0xff]
    %v388 = vld [vmem:[%s4 + $0x18] sm:$0xff]
    %v389 = vld [vmem:[%s6] sm:$0x1]
    %v391 = vlaneseq
    %v392 = vshrl.u32 %v391, 7
    %v393 = vsub.s32 0, %v392
    %v394 = vrot.slane %v389, %v393
    %v397 = vsel %vm144, %v377, 0
    %v400 = vsel %vm144, %v382, 0
    %402 = vmatprep.subr.mxu0 0.0
    %403 = vmatpush1.msra.mxu0 %v385
    %404 = vmatprep.subr.mxu0 0.0
    %405 = vmatpush1.msra.mxu0 %v386
    %406 = vmatprep.subr.mxu0 0.0
    %407 = vmatpush1.msra.mxu0 %v387
    %408 = vmatprep.subr.mxu0 0.0
    %409 = vmatpush1.msra.mxu0 %v388
    %410 = vmatprep.subr.mxu0 0.0
    %411 = vmatpush1.msra.mxu0 0.0
    %412 = vmatprep.subr.mxu0 0.0
    %413 = vmatpush1.msra.mxu0 0.0
    %414 = vmatprep.subr.mxu0 0.0
    %415 = vmatpush1.msra.mxu0 0.0
    %416 = vmatprep.subr.mxu0 0.0
    %417 = vmatpush1.msra.mxu0 0.0
    %418 = vmatprep.subr.mxu0 0.0
    %419 = vmatpush1.msra.mxu0 0.0
    %420 = vmatprep.subr.mxu0 0.0
    %421 = vmatpush1.msra.mxu0 0.0
    %422 = vmatprep.subr.mxu0 0.0
    %423 = vmatpush1.msra.mxu0 0.0
    %424 = vmatprep.subr.mxu0 0.0
    %425 = vmatpush1.msra.mxu0 0.0
    %426 = vmatprep.subr.mxu0 0.0
    %427 = vmatpush1.msra.mxu0 0.0
    %428 = vmatprep.subr.mxu0 0.0
    %429 = vmatpush1.msra.mxu0 0.0
    %430 = vmatprep.subr.mxu0 0.0
    %431 = vmatpush1.msra.mxu0 0.0
    %432 = vmatprep.subr.mxu0 0.0
    %433 = vmatpush1.msra.mxu0 0.0
    %434 = vmatprep.subr.mxu0 0.0
    %435 = vmatpush1.msra.mxu0 0.0
    %436 = vmatprep.subr.mxu0 0.0
    %437 = vmatpush1.msra.mxu0 0.0
    %438 = vmatprep.subr.mxu0 0.0
    %439 = vmatpush1.msra.mxu0 0.0
    %440 = vmatprep.subr.mxu0 0.0
    %441 = vmatpush1.msra.mxu0 0.0
    %442 = vmatprep.subr.mxu0 0.0
    %443 = vmatpush1.msra.mxu0 0.0
    %444 = vmatprep.subr.mxu0 0.0
    %445 = vmatpush1.msra.mxu0 0.0
    %446 = vmatprep.subr.mxu0 0.0
    %447 = vmatpush1.msra.mxu0 0.0
    %448 = vmatprep.subr.mxu0 0.0
    %449 = vmatpush1.msra.mxu0 0.0
    %450 = vmatprep.subr.mxu0 0.0
    %451 = vmatpush1.msra.mxu0 0.0
    %452 = vmatprep.subr.mxu0 0.0
    %453 = vmatpush1.msra.mxu0 0.0
    %454 = vmatprep.subr.mxu0 0.0
    %455 = vmatpush1.msra.mxu0 0.0
    %456 = vmatprep.subr.mxu0 0.0
    %457 = vmatpush1.msra.mxu0 0.0
    %458 = vmatprep.subr.mxu0 0.0
    %459 = vmatpush1.msra.mxu0 0.0
    %460 = vmatprep.subr.mxu0 0.0
    %461 = vmatpush1.msra.mxu0 0.0
    %462 = vmatprep.subr.mxu0 0.0
    %463 = vmatpush1.msra.mxu0 0.0
    %464 = vmatprep.subr.mxu0 0.0
    %465 = vmatpush1.msra.mxu0 0.0
    %466 = vmatprep.mubr.f32.mxu0 0.0
    %467 = vmatmul.mubr.f32.gmra.mrb[0].mxu0 %v397
    %v468 = vpop.f32.mrb[0].mxu0
    %v469 = vadd.f32 %v394, %v468
    %v470 = vpop.f32.mrb[0].mxu0
    %471 = vmatprep.mubr.f32.mxu0 0.0
    %472 = vmatmul.mubr.f32.gmra.mrb[0].mxu0 %v400
    %v473 = vpop.f32.mrb[0].mxu0
    %v474 = vadd.f32 %v394, %v473
    %v475 = vpop.f32.mrb[0].mxu0
    %476 = vdwg.mxu0
    %v477 = vmax.f32 %v469, 0.0
    %v478 = vmax.f32 %v474, 0.0
    %479 = vmatprep.subr.mxu0 0.0
    %480 = vmatpush1.msra.mxu0 %v477
    %481 = vmatprep.subr.mxu0 0.0
    %482 = vmatpush1.msra.mxu0 %v478
    %483 = vmatprep.subr.mxu0 0.0
    %484 = vmatpush1.msra.mxu0 0.0
    %485 = vmatprep.subr.mxu0 0.0
    %486 = vmatpush1.msra.mxu0 0.0
    %487 = vmatprep.subr.mxu0 0.0
    %488 = vmatpush1.msra.mxu0 0.0
    %489 = vmatprep.subr.mxu0 0.0
    %490 = vmatpush1.msra.mxu0 0.0
    %491 = vmatprep.subr.mxu0 0.0
    %492 = vmatpush1.msra.mxu0 0.0
    %493 = vmatprep.subr.mxu0 0.0
    %494 = vmatpush1.msra.mxu0 0.0
    %495 = vmatprep.subr.mxu0 0.0
    %496 = vmatpush1.msra.mxu0 0.0
    %497 = vmatprep.subr.mxu0 0.0
    %498 = vmatpush1.msra.mxu0 0.0
    %499 = vmatprep.subr.mxu0 0.0
    %500 = vmatpush1.msra.mxu0 0.0
    %501 = vmatprep.subr.mxu0 0.0
    %502 = vmatpush1.msra.mxu0 0.0
    %503 = vmatprep.subr.mxu0 0.0
    %504 = vmatpush1.msra.mxu0 0.0
    %505 = vmatprep.subr.mxu0 0.0
    %506 = vmatpush1.msra.mxu0 0.0
    %507 = vmatprep.subr.mxu0 0.0
    %508 = vmatpush1.msra.mxu0 0.0
    %509 = vmatprep.subr.mxu0 0.0
    %510 = vmatpush1.msra.mxu0 0.0
    %511 = vmatprep.subr.mxu0 0.0
    %512 = vmatpush1.msra.mxu0 0.0
    %513 = vmatprep.subr.mxu0 0.0
    %514 = vmatpush1.msra.mxu0 0.0
    %515 = vmatprep.subr.mxu0 0.0
    %516 = vmatpush1.msra.mxu0 0.0
    %517 = vmatprep.subr.mxu0 0.0
    %518 = vmatpush1.msra.mxu0 0.0
    %519 = vmatprep.subr.mxu0 0.0
    %520 = vmatpush1.msra.mxu0 0.0
    %521 = vmatprep.subr.mxu0 0.0
    %522 = vmatpush1.msra.mxu0 0.0
    %523 = vmatprep.subr.mxu0 0.0
    %524 = vmatpush1.msra.mxu0 0.0
    %525 = vmatprep.subr.mxu0 0.0
    %526 = vmatpush1.msra.mxu0 0.0
    %527 = vmatprep.subr.mxu0 0.0
    %528 = vmatpush1.msra.mxu0 0.0
    %529 = vmatprep.subr.mxu0 0.0
    %530 = vmatpush1.msra.mxu0 0.0
    %531 = vmatprep.subr.mxu0 0.0
    %532 = vmatpush1.msra.mxu0 0.0
    %533 = vmatprep.subr.mxu0 0.0
    %534 = vmatpush1.msra.mxu0 0.0
    %535 = vmatprep.subr.mxu0 0.0
    %536 = vmatpush1.msra.mxu0 0.0
    %537 = vmatprep.subr.mxu0 0.0
    %538 = vmatpush1.msra.mxu0 0.0
    %539 = vmatprep.subr.mxu0 0.0
    %540 = vmatpush1.msra.mxu0 0.0
    %541 = vmatprep.subr.mxu0 0.0
    %542 = vmatpush1.msra.mxu0 0.0
    %543 = vmatprep.mubr.f32.mxu0 0.0
    %544 = vmatmul.mubr.f32.gmra.mrb[0].mxu0 %v61
    %v545 = vpop.f32.mrb[0].mxu0
    %v546 = vadd.f32 0.0, %v545
    %v547 = vpop.f32.mrb[0].mxu0
    %548 = vdwg.mxu0
    %v549 = vld [vmem:[%s9] sm:$0xff]
    %v550 = vld [vmem:[%s9 + $0x8] sm:$0xff]
    %v551 = vld [vmem:[%s9 + $0x10] sm:$0xff]
    %v552 = vld [vmem:[%s9 + $0x18] sm:$0xff]
    %v553 = vld [vmem:[%s12] sm:$0x1]
    %v555 = vlaneseq
    %v556 = vshrl.u32 %v555, 7
    %v557 = vsub.s32 0, %v556
    %v558 = vrot.slane %v553, %v557
    %v561 = vsel %vm144, %v546, 0
    %563 = vmatprep.subr.mxu0 0.0
    %564 = vmatpush1.msra.mxu0 %v549
    %565 = vmatprep.subr.mxu0 0.0
    %566 = vmatpush1.msra.mxu0 %v550
    %567 = vmatprep.subr.mxu0 0.0
    %568 = vmatpush1.msra.mxu0 %v551
    %569 = vmatprep.subr.mxu0 0.0
    %570 = vmatpush1.msra.mxu0 %v552
    %571 = vmatprep.subr.mxu0 0.0
    %572 = vmatpush1.msra.mxu0 0.0
    %573 = vmatprep.subr.mxu0 0.0
    %574 = vmatpush1.msra.mxu0 0.0
    %575 = vmatprep.subr.mxu0 0.0
    %576 = vmatpush1.msra.mxu0 0.0
    %577 = vmatprep.subr.mxu0 0.0
    %578 = vmatpush1.msra.mxu0 0.0
    %579 = vmatprep.subr.mxu0 0.0
    %580 = vmatpush1.msra.mxu0 0.0
    %581 = vmatprep.subr.mxu0 0.0
    %582 = vmatpush1.msra.mxu0 0.0
    %583 = vmatprep.subr.mxu0 0.0
    %584 = vmatpush1.msra.mxu0 0.0
    %585 = vmatprep.subr.mxu0 0.0
    %586 = vmatpush1.msra.mxu0 0.0
    %587 = vmatprep.subr.mxu0 0.0
    %588 = vmatpush1.msra.mxu0 0.0
    %589 = vmatprep.subr.mxu0 0.0
    %590 = vmatpush1.msra.mxu0 0.0
    %591 = vmatprep.subr.mxu0 0.0
    %592 = vmatpush1.msra.mxu0 0.0
    %593 = vmatprep.subr.mxu0 0.0
    %594 = vmatpush1.msra.mxu0 0.0
    %595 = vmatprep.subr.mxu0 0.0
    %596 = vmatpush1.msra.mxu0 0.0
    %597 = vmatprep.subr.mxu0 0.0
    %598 = vmatpush1.msra.mxu0 0.0
    %599 = vmatprep.subr.mxu0 0.0
    %600 = vmatpush1.msra.mxu0 0.0
    %601 = vmatprep.subr.mxu0 0.0
    %602 = vmatpush1.msra.mxu0 0.0
    %603 = vmatprep.subr.mxu0 0.0
    %604 = vmatpush1.msra.mxu0 0.0
    %605 = vmatprep.subr.mxu0 0.0
    %606 = vmatpush1.msra.mxu0 0.0
    %607 = vmatprep.subr.mxu0 0.0
    %608 = vmatpush1.msra.mxu0 0.0
    %609 = vmatprep.subr.mxu0 0.0
    %610 = vmatpush1.msra.mxu0 0.0
    %611 = vmatprep.subr.mxu0 0.0
    %612 = vmatpush1.msra.mxu0 0.0
    %613 = vmatprep.subr.mxu0 0.0
    %614 = vmatpush1.msra.mxu0 0.0
    %615 = vmatprep.subr.mxu0 0.0
    %616 = vmatpush1.msra.mxu0 0.0
    %617 = vmatprep.subr.mxu0 0.0
    %618 = vmatpush1.msra.mxu0 0.0
    %619 = vmatprep.subr.mxu0 0.0
    %620 = vmatpush1.msra.mxu0 0.0
    %621 = vmatprep.subr.mxu0 0.0
    %622 = vmatpush1.msra.mxu0 0.0
    %623 = vmatprep.subr.mxu0 0.0
    %624 = vmatpush1.msra.mxu0 0.0
    %625 = vmatprep.subr.mxu0 0.0
    %626 = vmatpush1.msra.mxu0 0.0
    %627 = vmatprep.mubr.f32.mxu0 0.0
    %628 = vmatmul.mubr.f32.gmra.mrb[0].mxu0 %v561
    %v629 = vpop.f32.mrb[0].mxu0
    %v630 = vadd.f32 %v558, %v629
    %v631 = vpop.f32.mrb[0].mxu0
    %632 = vdwg.mxu0
    %v633 = vmax.f32 %v630, 0.0
    %v634 = vadd.f32 %v218, %v633
    %635 = vmatprep.subr.mxu0 0.0
    %636 = vmatpush1.msra.mxu0 %v477
    %637 = vmatprep.subr.mxu0 0.0
    %638 = vmatpush1.msra.mxu0 %v478
    %639 = vmatprep.subr.mxu0 0.0
    %640 = vmatpush1.msra.mxu0 0.0
    %641 = vmatprep.subr.mxu0 0.0
    %642 = vmatpush1.msra.mxu0 0.0
    %643 = vmatprep.subr.mxu0 0.0
    %644 = vmatpush1.msra.mxu0 0.0
    %645 = vmatprep.subr.mxu0 0.0
    %646 = vmatpush1.msra.mxu0 0.0
    %647 = vmatprep.subr.mxu0 0.0
    %648 = vmatpush1.msra.mxu0 0.0
    %649 = vmatprep.subr.mxu0 0.0
    %650 = vmatpush1.msra.mxu0 0.0
    %651 = vmatprep.subr.mxu0 0.0
    %652 = vmatpush1.msra.mxu0 0.0
    %653 = vmatprep.subr.mxu0 0.0
    %654 = vmatpush1.msra.mxu0 0.0
    %655 = vmatprep.subr.mxu0 0.0
    %656 = vmatpush1.msra.mxu0 0.0
    %657 = vmatprep.subr.mxu0 0.0
    %658 = vmatpush1.msra.mxu0 0.0
    %659 = vmatprep.subr.mxu0 0.0
    %660 = vmatpush1.msra.mxu0 0.0
    %661 = vmatprep.subr.mxu0 0.0
    %662 = vmatpush1.msra.mxu0 0.0
    %663 = vmatprep.subr.mxu0 0.0
    %664 = vmatpush1.msra.mxu0 0.0
    %665 = vmatprep.subr.mxu0 0.0
    %666 = vmatpush1.msra.mxu0 0.0
    %667 = vmatprep.subr.mxu0 0.0
    %668 = vmatpush1.msra.mxu0 0.0
    %669 = vmatprep.subr.mxu0 0.0
    %670 = vmatpush1.msra.mxu0 0.0
    %671 = vmatprep.subr.mxu0 0.0
    %672 = vmatpush1.msra.mxu0 0.0
    %673 = vmatprep.subr.mxu0 0.0
    %674 = vmatpush1.msra.mxu0 0.0
    %675 = vmatprep.subr.mxu0 0.0
    %676 = vmatpush1.msra.mxu0 0.0
    %677 = vmatprep.subr.mxu0 0.0
    %678 = vmatpush1.msra.mxu0 0.0
    %679 = vmatprep.subr.mxu0 0.0
    %680 = vmatpush1.msra.mxu0 0.0
    %681 = vmatprep.subr.mxu0 0.0
    %682 = vmatpush1.msra.mxu0 0.0
    %683 = vmatprep.subr.mxu0 0.0
    %684 = vmatpush1.msra.mxu0 0.0
    %685 = vmatprep.subr.mxu0 0.0
    %686 = vmatpush1.msra.mxu0 0.0
    %687 = vmatprep.subr.mxu0 0.0
    %688 = vmatpush1.msra.mxu0 0.0
    %689 = vmatprep.subr.mxu0 0.0
    %690 = vmatpush1.msra.mxu0 0.0
    %691 = vmatprep.subr.mxu0 0.0
    %692 = vmatpush1.msra.mxu0 0.0
    %693 = vmatprep.subr.mxu0 0.0
    %694 = vmatpush1.msra.mxu0 0.0
    %695 = vmatprep.subr.mxu0 0.0
    %696 = vmatpush1.msra.mxu0 0.0
    %697 = vmatprep.subr.mxu0 0.0
    %698 = vmatpush1.msra.mxu0 0.0
    %699 = vmatprep.mubr.f32.mxu0 0.0
    %700 = vmatmul.mubr.f32.gmra.mrb[0].mxu0 %v305
    %v701 = vpop.f32.mrb[0].mxu0
    %v702 = vadd.f32 0.0, %v701
    %v703 = vpop.f32.mrb[0].mxu0
    %704 = vmatprep.mubr.f32.mxu0 0.0
    %705 = vmatmul.mubr.f32.gmra.mrb[0].mxu0 %v308
    %v706 = vpop.f32.mrb[0].mxu0
    %v707 = vadd.f32 0.0, %v706
    %v708 = vpop.f32.mrb[0].mxu0
    %709 = vdwg.mxu0
    %v710 = vld [vmem:[%s5] sm:$0xff]
    %v711 = vld [vmem:[%s5 + $0x8] sm:$0xff]
    %v712 = vld [vmem:[%s5 + $0x10] sm:$0xff]
    %v713 = vld [vmem:[%s5 + $0x18] sm:$0xff]
    %v714 = vld [vmem:[%s7] sm:$0x1]
    %v716 = vlaneseq
    %v717 = vshrl.u32 %v716, 7
    %v718 = vsub.s32 0, %v717
    %v719 = vrot.slane %v714, %v718
    %v722 = vsel %vm144, %v702, 0
    %v725 = vsel %vm144, %v707, 0
    %727 = vmatprep.subr.mxu0 0.0
    %728 = vmatpush1.msra.mxu0 %v710
    %729 = vmatprep.subr.mxu0 0.0
    %730 = vmatpush1.msra.mxu0 %v711
    %731 = vmatprep.subr.mxu0 0.0
    %732 = vmatpush1.msra.mxu0 %v712
    %733 = vmatprep.subr.mxu0 0.0
    %734 = vmatpush1.msra.mxu0 %v713
    %735 = vmatprep.subr.mxu0 0.0
    %736 = vmatpush1.msra.mxu0 0.0
    %737 = vmatprep.subr.mxu0 0.0
    %738 = vmatpush1.msra.mxu0 0.0
    %739 = vmatprep.subr.mxu0 0.0
    %740 = vmatpush1.msra.mxu0 0.0
    %741 = vmatprep.subr.mxu0 0.0
    %742 = vmatpush1.msra.mxu0 0.0
    %743 = vmatprep.subr.mxu0 0.0
    %744 = vmatpush1.msra.mxu0 0.0
    %745 = vmatprep.subr.mxu0 0.0
    %746 = vmatpush1.msra.mxu0 0.0
    %747 = vmatprep.subr.mxu0 0.0
    %748 = vmatpush1.msra.mxu0 0.0
    %749 = vmatprep.subr.mxu0 0.0
    %750 = vmatpush1.msra.mxu0 0.0
    %751 = vmatprep.subr.mxu0 0.0
    %752 = vmatpush1.msra.mxu0 0.0
    %753 = vmatprep.subr.mxu0 0.0
    %754 = vmatpush1.msra.mxu0 0.0
    %755 = vmatprep.subr.mxu0 0.0
    %756 = vmatpush1.msra.mxu0 0.0
    %757 = vmatprep.subr.mxu0 0.0
    %758 = vmatpush1.msra.mxu0 0.0
    %759 = vmatprep.subr.mxu0 0.0
    %760 = vmatpush1.msra.mxu0 0.0
    %761 = vmatprep.subr.mxu0 0.0
    %762 = vmatpush1.msra.mxu0 0.0
    %763 = vmatprep.subr.mxu0 0.0
    %764 = vmatpush1.msra.mxu0 0.0
    %765 = vmatprep.subr.mxu0 0.0
    %766 = vmatpush1.msra.mxu0 0.0
    %767 = vmatprep.subr.mxu0 0.0
    %768 = vmatpush1.msra.mxu0 0.0
    %769 = vmatprep.subr.mxu0 0.0
    %770 = vmatpush1.msra.mxu0 0.0
    %771 = vmatprep.subr.mxu0 0.0
    %772 = vmatpush1.msra.mxu0 0.0
    %773 = vmatprep.subr.mxu0 0.0
    %774 = vmatpush1.msra.mxu0 0.0
    %775 = vmatprep.subr.mxu0 0.0
    %776 = vmatpush1.msra.mxu0 0.0
    %777 = vmatprep.subr.mxu0 0.0
    %778 = vmatpush1.msra.mxu0 0.0
    %779 = vmatprep.subr.mxu0 0.0
    %780 = vmatpush1.msra.mxu0 0.0
    %781 = vmatprep.subr.mxu0 0.0
    %782 = vmatpush1.msra.mxu0 0.0
    %783 = vmatprep.subr.mxu0 0.0
    %784 = vmatpush1.msra.mxu0 0.0
    %785 = vmatprep.subr.mxu0 0.0
    %786 = vmatpush1.msra.mxu0 0.0
    %787 = vmatprep.subr.mxu0 0.0
    %788 = vmatpush1.msra.mxu0 0.0
    %789 = vmatprep.subr.mxu0 0.0
    %790 = vmatpush1.msra.mxu0 0.0
    %791 = vmatprep.mubr.f32.mxu0 0.0
    %792 = vmatmul.mubr.f32.gmra.mrb[0].mxu0 %v722
    %v793 = vpop.f32.mrb[0].mxu0
    %v794 = vadd.f32 %v719, %v793
    %v795 = vpop.f32.mrb[0].mxu0
    %796 = vmatprep.mubr.f32.mxu0 0.0
    %797 = vmatmul.mubr.f32.gmra.mrb[0].mxu0 %v725
    %v798 = vpop.f32.mrb[0].mxu0
    %v799 = vadd.f32 %v719, %v798
    %v800 = vpop.f32.mrb[0].mxu0
    %801 = vdwg.mxu0
    %v802 = vmax.f32 %v794, 0.0
    %v803 = vmax.f32 %v799, 0.0
    %804 = vmatprep.subr.mxu0 0.0
    %805 = vmatpush1.msra.mxu0 %v802
    %806 = vmatprep.subr.mxu0 0.0
    %807 = vmatpush1.msra.mxu0 %v803
    %808 = vmatprep.subr.mxu0 0.0
    %809 = vmatpush1.msra.mxu0 0.0
    %810 = vmatprep.subr.mxu0 0.0
    %811 = vmatpush1.msra.mxu0 0.0
    %812 = vmatprep.subr.mxu0 0.0
    %813 = vmatpush1.msra.mxu0 0.0
    %814 = vmatprep.subr.mxu0 0.0
    %815 = vmatpush1.msra.mxu0 0.0
    %816 = vmatprep.subr.mxu0 0.0
    %817 = vmatpush1.msra.mxu0 0.0
    %818 = vmatprep.subr.mxu0 0.0
    %819 = vmatpush1.msra.mxu0 0.0
    %820 = vmatprep.subr.mxu0 0.0
    %821 = vmatpush1.msra.mxu0 0.0
    %822 = vmatprep.subr.mxu0 0.0
    %823 = vmatpush1.msra.mxu0 0.0
    %824 = vmatprep.subr.mxu0 0.0
    %825 = vmatpush1.msra.mxu0 0.0
    %826 = vmatprep.subr.mxu0 0.0
    %827 = vmatpush1.msra.mxu0 0.0
    %828 = vmatprep.subr.mxu0 0.0
    %829 = vmatpush1.msra.mxu0 0.0
    %830 = vmatprep.subr.mxu0 0.0
    %831 = vmatpush1.msra.mxu0 0.0
    %832 = vmatprep.subr.mxu0 0.0
    %833 = vmatpush1.msra.mxu0 0.0
    %834 = vmatprep.subr.mxu0 0.0
    %835 = vmatpush1.msra.mxu0 0.0
    %836 = vmatprep.subr.mxu0 0.0
    %837 = vmatpush1.msra.mxu0 0.0
    %838 = vmatprep.subr.mxu0 0.0
    %839 = vmatpush1.msra.mxu0 0.0
    %840 = vmatprep.subr.mxu0 0.0
    %841 = vmatpush1.msra.mxu0 0.0
    %842 = vmatprep.subr.mxu0 0.0
    %843 = vmatpush1.msra.mxu0 0.0
    %844 = vmatprep.subr.mxu0 0.0
    %845 = vmatpush1.msra.mxu0 0.0
    %846 = vmatprep.subr.mxu0 0.0
    %847 = vmatpush1.msra.mxu0 0.0
    %848 = vmatprep.subr.mxu0 0.0
    %849 = vmatpush1.msra.mxu0 0.0
    %850 = vmatprep.subr.mxu0 0.0
    %851 = vmatpush1.msra.mxu0 0.0
    %852 = vmatprep.subr.mxu0 0.0
    %853 = vmatpush1.msra.mxu0 0.0
    %854 = vmatprep.subr.mxu0 0.0
    %855 = vmatpush1.msra.mxu0 0.0
    %856 = vmatprep.subr.mxu0 0.0
    %857 = vmatpush1.msra.mxu0 0.0
    %858 = vmatprep.subr.mxu0 0.0
    %859 = vmatpush1.msra.mxu0 0.0
    %860 = vmatprep.subr.mxu0 0.0
    %861 = vmatpush1.msra.mxu0 0.0
    %862 = vmatprep.subr.mxu0 0.0
    %863 = vmatpush1.msra.mxu0 0.0
    %864 = vmatprep.subr.mxu0 0.0
    %865 = vmatpush1.msra.mxu0 0.0
    %866 = vmatprep.subr.mxu0 0.0
    %867 = vmatpush1.msra.mxu0 0.0
    %868 = vmatprep.mubr.f32.mxu0 0.0
    %869 = vmatmul.mubr.f32.gmra.mrb[0].mxu0 %v61
    %v870 = vpop.f32.mrb[0].mxu0
    %v871 = vadd.f32 0.0, %v870
    %v872 = vpop.f32.mrb[0].mxu0
    %873 = vdwg.mxu0
    %v874 = vld [vmem:[%s10] sm:$0xff]
    %v875 = vld [vmem:[%s10 + $0x8] sm:$0xff]
    %v876 = vld [vmem:[%s10 + $0x10] sm:$0xff]
    %v877 = vld [vmem:[%s10 + $0x18] sm:$0xff]
    %v878 = vld [vmem:[%s13] sm:$0x1]
    %v880 = vlaneseq
    %v881 = vshrl.u32 %v880, 7
    %v882 = vsub.s32 0, %v881
    %v883 = vrot.slane %v878, %v882
    %v886 = vsel %vm144, %v871, 0
    %888 = vmatprep.subr.mxu0 0.0
    %889 = vmatpush1.msra.mxu0 %v874
    %890 = vmatprep.subr.mxu0 0.0
    %891 = vmatpush1.msra.mxu0 %v875
    %892 = vmatprep.subr.mxu0 0.0
    %893 = vmatpush1.msra.mxu0 %v876
    %894 = vmatprep.subr.mxu0 0.0
    %895 = vmatpush1.msra.mxu0 %v877
    %896 = vmatprep.subr.mxu0 0.0
    %897 = vmatpush1.msra.mxu0 0.0
    %898 = vmatprep.subr.mxu0 0.0
    %899 = vmatpush1.msra.mxu0 0.0
    %900 = vmatprep.subr.mxu0 0.0
    %901 = vmatpush1.msra.mxu0 0.0
    %902 = vmatprep.subr.mxu0 0.0
    %903 = vmatpush1.msra.mxu0 0.0
    %904 = vmatprep.subr.mxu0 0.0
    %905 = vmatpush1.msra.mxu0 0.0
    %906 = vmatprep.subr.mxu0 0.0
    %907 = vmatpush1.msra.mxu0 0.0
    %908 = vmatprep.subr.mxu0 0.0
    %909 = vmatpush1.msra.mxu0 0.0
    %910 = vmatprep.subr.mxu0 0.0
    %911 = vmatpush1.msra.mxu0 0.0
    %912 = vmatprep.subr.mxu0 0.0
    %913 = vmatpush1.msra.mxu0 0.0
    %914 = vmatprep.subr.mxu0 0.0
    %915 = vmatpush1.msra.mxu0 0.0
    %916 = vmatprep.subr.mxu0 0.0
    %917 = vmatpush1.msra.mxu0 0.0
    %918 = vmatprep.subr.mxu0 0.0
    %919 = vmatpush1.msra.mxu0 0.0
    %920 = vmatprep.subr.mxu0 0.0
    %921 = vmatpush1.msra.mxu0 0.0
    %922 = vmatprep.subr.mxu0 0.0
    %923 = vmatpush1.msra.mxu0 0.0
    %924 = vmatprep.subr.mxu0 0.0
    %925 = vmatpush1.msra.mxu0 0.0
    %926 = vmatprep.subr.mxu0 0.0
    %927 = vmatpush1.msra.mxu0 0.0
    %928 = vmatprep.subr.mxu0 0.0
    %929 = vmatpush1.msra.mxu0 0.0
    %930 = vmatprep.subr.mxu0 0.0
    %931 = vmatpush1.msra.mxu0 0.0
    %932 = vmatprep.subr.mxu0 0.0
    %933 = vmatpush1.msra.mxu0 0.0
    %934 = vmatprep.subr.mxu0 0.0
    %935 = vmatpush1.msra.mxu0 0.0
    %936 = vmatprep.subr.mxu0 0.0
    %937 = vmatpush1.msra.mxu0 0.0
    %938 = vmatprep.subr.mxu0 0.0
    %939 = vmatpush1.msra.mxu0 0.0
    %940 = vmatprep.subr.mxu0 0.0
    %941 = vmatpush1.msra.mxu0 0.0
    %942 = vmatprep.subr.mxu0 0.0
    %943 = vmatpush1.msra.mxu0 0.0
    %944 = vmatprep.subr.mxu0 0.0
    %945 = vmatpush1.msra.mxu0 0.0
    %946 = vmatprep.subr.mxu0 0.0
    %947 = vmatpush1.msra.mxu0 0.0
    %948 = vmatprep.subr.mxu0 0.0
    %949 = vmatpush1.msra.mxu0 0.0
    %950 = vmatprep.subr.mxu0 0.0
    %951 = vmatpush1.msra.mxu0 0.0
    %952 = vmatprep.mubr.f32.mxu0 0.0
    %953 = vmatmul.mubr.f32.gmra.mrb[0].mxu0 %v886
    %v954 = vpop.f32.mrb[0].mxu0
    %v955 = vadd.f32 %v883, %v954
    %v956 = vpop.f32.mrb[0].mxu0
    %957 = vdwg.mxu0
    %v958 = vmax.f32 %v955, 0.0
    %v959 = vadd.f32 %v634, %v958
    %v960 = vld [vmem:[%s14] sm:$0xff]
    %v961 = vld [vmem:[%s14 + $0x8] sm:$0xff]
    %v962 = vld [vmem:[%s14 + $0x10] sm:$0xff]
    %v963 = vld [vmem:[%s14 + $0x18] sm:$0xff]
    %v964 = vld [vmem:[%s15] sm:$0x1]
    %v966 = vlaneseq
    %v967 = vshrl.u32 %v966, 7
    %v968 = vsub.s32 0, %v967
    %v969 = vrot.slane %v964, %v968
    %v972 = vsel %vm144, %v959, 0
    %974 = vmatprep.subr.mxu0 0.0
    %975 = vmatpush1.msra.mxu0 %v960
    %976 = vmatprep.subr.mxu0 0.0
    %977 = vmatpush1.msra.mxu0 %v961
    %978 = vmatprep.subr.mxu0 0.0
    %979 = vmatpush1.msra.mxu0 %v962
    %980 = vmatprep.subr.mxu0 0.0
    %981 = vmatpush1.msra.mxu0 %v963
    %982 = vmatprep.subr.mxu0 0.0
    %983 = vmatpush1.msra.mxu0 0.0
    %984 = vmatprep.subr.mxu0 0.0
    %985 = vmatpush1.msra.mxu0 0.0
    %986 = vmatprep.subr.mxu0 0.0
    %987 = vmatpush1.msra.mxu0 0.0
    %988 = vmatprep.subr.mxu0 0.0
    %989 = vmatpush1.msra.mxu0 0.0
    %990 = vmatprep.subr.mxu0 0.0
    %991 = vmatpush1.msra.mxu0 0.0
    %992 = vmatprep.subr.mxu0 0.0
    %993 = vmatpush1.msra.mxu0 0.0
    %994 = vmatprep.subr.mxu0 0.0
    %995 = vmatpush1.msra.mxu0 0.0
    %996 = vmatprep.subr.mxu0 0.0
    %997 = vmatpush1.msra.mxu0 0.0
    %998 = vmatprep.subr.mxu0 0.0
    %999 = vmatpush1.msra.mxu0 0.0
    %1000 = vmatprep.subr.mxu0 0.0
    %1001 = vmatpush1.msra.mxu0 0.0
    %1002 = vmatprep.subr.mxu0 0.0
    %1003 = vmatpush1.msra.mxu0 0.0
    %1004 = vmatprep.subr.mxu0 0.0
    %1005 = vmatpush1.msra.mxu0 0.0
    %1006 = vmatprep.subr.mxu0 0.0
    %1007 = vmatpush1.msra.mxu0 0.0
    %1008 = vmatprep.subr.mxu0 0.0
    %1009 = vmatpush1.msra.mxu0 0.0
    %1010 = vmatprep.subr.mxu0 0.0
    %1011 = vmatpush1.msra.mxu0 0.0
    %1012 = vmatprep.subr.mxu0 0.0
    %1013 = vmatpush1.msra.mxu0 0.0
    %1014 = vmatprep.subr.mxu0 0.0
    %1015 = vmatpush1.msra.mxu0 0.0
    %1016 = vmatprep.subr.mxu0 0.0
    %1017 = vmatpush1.msra.mxu0 0.0
    %1018 = vmatprep.subr.mxu0 0.0
    %1019 = vmatpush1.msra.mxu0 0.0
    %1020 = vmatprep.subr.mxu0 0.0
    %1021 = vmatpush1.msra.mxu0 0.0
    %1022 = vmatprep.subr.mxu0 0.0
    %1023 = vmatpush1.msra.mxu0 0.0
    %1024 = vmatprep.subr.mxu0 0.0
    %1025 = vmatpush1.msra.mxu0 0.0
    %1026 = vmatprep.subr.mxu0 0.0
    %1027 = vmatpush1.msra.mxu0 0.0
    %1028 = vmatprep.subr.mxu0 0.0
    %1029 = vmatpush1.msra.mxu0 0.0
    %1030 = vmatprep.subr.mxu0 0.0
    %1031 = vmatpush1.msra.mxu0 0.0
    %1032 = vmatprep.subr.mxu0 0.0
    %1033 = vmatpush1.msra.mxu0 0.0
    %1034 = vmatprep.subr.mxu0 0.0
    %1035 = vmatpush1.msra.mxu0 0.0
    %1036 = vmatprep.subr.mxu0 0.0
    %1037 = vmatpush1.msra.mxu0 0.0
    %1038 = vmatprep.mubr.f32.mxu0 0.0
    %1039 = vmatmul.mubr.f32.gmra.mrb[0].mxu0 %v972
    %v1040 = vpop.f32.mrb[0].mxu0
    %v1041 = vadd.f32 %v969, %v1040
    %v1042 = vpop.f32.mrb[0].mxu0
    %1043 = vdwg.mxu0
    %vm1044 = vcmask 1041408
    %v1045 = vsel %vm1044, %v1041, -inf
    %1046 = vmax.xlane.f32.xlu0 %v1045
    %v1047 = vpop.xlane.xlu0 %1046
    %v1048 = vsub.f32 %v1041, %v1047
    %v1049 = vmul.f32 %v1048, 1.442695
    %v1050 = vpow.pop %v1049
    %v1051 = vsel %vm1044, %v1050, 0.0
    %1052 = vadd.xlane.f32.xlu0 %v1051
    %v1053 = vpop.xlane.xlu0 %1052
    %v1054 = vlog2.pop %v1053
    %v1055 = vmul.f32 %v1054, 0.6931472
    %v1056 = vadd.f32 %v1055, %v1047
    %v1057 = vsub.f32 %v1041, %v1056
    %1058 = vst [vmem:[#allocation2] sm:$0x3] %v1057
    // Predicated region
    $region66: #{cpa_forward.1} parent=1 // pred_check
      _
    $region67: #{cpa_forward.1} parent=1 // pred_check_branch
      %1060 = sbr.rel (0) target = $region69
    $region68: #{cpa_forward.1} parent=1 // pred_region
      %s1062 = ssub.s32 32, 32
      %1063 = vsyncadd [#allocation3], %s1062
      %s1065 = sshll.u32 [#allocation2], 4
      %s1066 = int_to_ptr.vmem [resolvable:$true] %s1065
      %1068 = dma.vmem_to_hbm [thread:$0]  %s1066, 32, %s16, [#allocation3]
    $region69: #{cpa_forward.1} parent=1 // pred_fallthru
      _
    // Predicated region
    $region70: #{cpa_forward.1} parent=1 // pred_check
      _
    $region71: #{cpa_forward.1} parent=1 // pred_check_branch
      %1070 = sbr.rel (0) target = $region73
    $region72: #{cpa_forward.1} parent=1 // pred_region
      %1071 = dma.done [#allocation3], 32
    $region73: #{cpa_forward.1} parent=1 // pred_fallthru
      _
    %1072 = vsyncpa [#allocation3], 1

</llo_original>
